<compile_context>
chip_gen: v7x
topology: tpu7x:2x2x1
jax: 0.10.0
libtpu: 0.0.40
codegen_flags: <defaults>
</compile_context>

<pallas_src>
import numpy as np

import jax
import jax.numpy as jnp
from jax.experimental import pallas as pl
from jax.experimental.pallas import tpu as pltpu

LANE = 128              # pad feature widths to a multiple of the 128-lane vreg
SUBLANE = 8             # f32 sublane granularity for batch tiles
MAX_BATCH_TILE = 256    # re-derive upward for v6e/v5e (128 MiB VMEM) if widths grow;
                        # conservative enough for v7x's 64 MiB
VMEM_LIMIT_BYTES = 32 * 1024 * 1024   # explicit scoped-VMEM limit (valid on v5e/v6e/v7x)
BN_EPS = 1e-5


def _round_up(x, m):
    return (x + m - 1) // m * m


def _pad2d(a, rows, cols):
    return jnp.pad(a, ((0, rows - a.shape[0]), (0, cols - a.shape[1])))


def _resident_spec(x):
    """Whole-array, VMEM-resident across the batch grid (constant index_map)."""
    return pl.BlockSpec(tuple(x.shape), lambda t: (0, 0))


def _batch_spec(tile_b, width):
    """Batch-tiled 2-D spec: one (tile_b, width) tile per grid step."""
    return pl.BlockSpec((tile_b, width), lambda t: (t, 0))


def _cparams(semantics):
    return pltpu.CompilerParams(
        dimension_semantics=(semantics,),
        vmem_limit_bytes=VMEM_LIMIT_BYTES,
    )


def _make_first_layer_kernel(emb_dims, n_cont, n_valid, tile_b):
    """Fused: embedding gather (one-hot matmul, exact in f32) + first Linear
    (per feature group, bf16 MXU operands, f32 acc) + ReLU + masked single-pass
    BN statistics (sum, sum of squares) accumulated into resident outputs."""
    n_emb = len(emb_dims)

    def kernel(*refs):
        i = 0
        cat_ref = cont_ref = w_cont = None
        if n_emb:
            cat_ref = refs[i]; i += 1
        if n_cont:
            cont_ref = refs[i]; i += 1
        tables = refs[i:i + n_emb]; i += n_emb
        w_embs = refs[i:i + n_emb]; i += n_emb
        if n_cont:
            w_cont = refs[i]; i += 1
        b_ref = refs[i]; i += 1
        h_ref, sum_ref, sq_ref = refs[i], refs[i + 1], refs[i + 2]

        hp = h_ref.shape[-1]
        acc = jnp.zeros((tile_b, hp), jnp.float32)
        for f in range(n_emb):
            n_cat = emb_dims[f][0]
            # One-hot row selection of the embedding table (exact in f32).
            onehot = (jax.lax.broadcasted_iota(jnp.int32, (tile_b, n_cat), 1)
                      == cat_ref[:, f:f + 1]).astype(jnp.float32)
            emb = jnp.dot(onehot, tables[f][...],
                          preferred_element_type=jnp.float32)
            acc = acc + jnp.dot(emb.astype(jnp.bfloat16), w_embs[f][...],
                                preferred_element_type=jnp.float32)
        if n_cont:
            acc = acc + jnp.dot(cont_ref[...].astype(jnp.bfloat16), w_cont[...],
                                preferred_element_type=jnp.float32)

        h = jnp.maximum(acc + b_ref[...], 0.0)      # ReLU, f32
        h_ref[...] = h

        t = pl.program_id(0)

        @pl.when(t == 0)
        def _():
            sum_ref[...] = jnp.zeros_like(sum_ref)
            sq_ref[...] = jnp.zeros_like(sq_ref)

        # Mask padded batch rows out of the statistics (n_valid is static).
        row = jax.lax.broadcasted_iota(jnp.int32, (tile_b, 1), 0) + t * tile_b
        valid = (row < n_valid).astype(jnp.float32)
        hm = h * valid
        sum_ref[...] += jnp.sum(hm, axis=0, keepdims=True)
        sq_ref[...] += jnp.sum(hm * h, axis=0, keepdims=True)

    return kernel


def _make_bn_linear_kernel(n_valid, tile_b, with_relu_and_stats):
    """BatchNorm1d (training-mode batch stats from precomputed sum / sumsq,
    biased var, gamma=1, beta=0) + Linear.  Hidden layers additionally apply
    ReLU and accumulate stats for the next BN; the output layer does not."""
    inv_n = 1.0 / float(n_valid)

    def kernel(x_ref, xsum_ref, xsq_ref, w_ref, b_ref, *out_refs):
        mean = xsum_ref[...] * inv_n
        var = jnp.maximum(xsq_ref[...] * inv_n - mean * mean, 0.0)  # clamp >= 0
        rstd = jax.lax.rsqrt(var + BN_EPS)
        xn = (x_ref[...] - mean) * rstd                              # f32 BN math
        y = jnp.dot(xn.astype(jnp.bfloat16), w_ref[...],
                    preferred_element_type=jnp.float32) + b_ref[...]

        if with_relu_and_stats:
            o_ref, sum_ref, sq_ref = out_refs
            h = jnp.maximum(y, 0.0)
            o_ref[...] = h

            t = pl.program_id(0)

            @pl.when(t == 0)
            def _():
                sum_ref[...] = jnp.zeros_like(sum_ref)
                sq_ref[...] = jnp.zeros_like(sq_ref)

            row = jax.lax.broadcasted_iota(jnp.int32, (tile_b, 1), 0) + t * tile_b
            valid = (row < n_valid).astype(jnp.float32)
            hm = h * valid
            sum_ref[...] += jnp.sum(hm, axis=0, keepdims=True)
            sq_ref[...] += jnp.sum(hm * h, axis=0, keepdims=True)
        else:
            (o_ref,) = out_refs
            o_ref[...] = y

    return kernel


class FeedForwardNNPallas:
    """Deterministically-initialized JAX/Pallas port of the PyTorch FeedForwardNN
    forward pass (eval-mode dropout, training-mode BatchNorm batch statistics)."""

    def __init__(self, emb_dims, no_of_cont, lin_layer_sizes, output_size,
                 emb_dropout=0.0, lin_layer_dropouts=(), *, key):
        self.emb_dims = list(emb_dims)
        self.no_of_embs = sum(d for _, d in emb_dims)
        self.no_of_cont = no_of_cont
        self.lin_layer_sizes = list(lin_layer_sizes)
        self.output_size = output_size
        del emb_dropout, lin_layer_dropouts   # identity in this forward (see TODO)

        n_keys = len(emb_dims) + 2 * (len(lin_layer_sizes) + 1)
        keys = iter(jax.random.split(key, n_keys))

        # nn.Embedding default init: N(0, 1).
        self.emb_tables = [
            jax.random.normal(next(keys), (n_cat, dim), dtype=jnp.float32)
            for n_cat, dim in emb_dims
        ]

        # Linear layers stored transposed (in, out); kaiming_normal_ (fan_in, relu).
        in_sizes = [self.no_of_embs + no_of_cont] + list(lin_layer_sizes[:-1])
        self.lin_ws, self.lin_bs = [], []
        for fan_in, fan_out in zip(in_sizes, lin_layer_sizes):
            std = (2.0 / fan_in) ** 0.5
            w = std * jax.random.normal(next(keys), (fan_in, fan_out), jnp.float32)
            bound = 1.0 / (fan_in ** 0.5)
            b = jax.random.uniform(next(keys), (fan_out,), jnp.float32, -bound, bound)
            self.lin_ws.append(w)
            self.lin_bs.append(b)

        fan_in = lin_layer_sizes[-1]
        std = (2.0 / fan_in) ** 0.5
        self.w_out = std * jax.random.normal(next(keys), (fan_in, output_size), jnp.float32)
        bound = 1.0 / (fan_in ** 0.5)
        self.b_out = jax.random.uniform(next(keys), (output_size,), jnp.float32, -bound, bound)

        self._prepare_padded_params()

    def _prepare_padded_params(self):
        """Lane-dense (multiple-of-128) zero padding + bf16 weight casts."""
        self.hid_pad = [_round_up(h, LANE) for h in self.lin_layer_sizes]
        self.out_pad = _round_up(self.output_size, LANE)

        # First layer: pad the output lanes and split the rows per input
        # feature group so the embedding gather can be fused without ever
        # materializing the concatenated (lane-sparse) input slab.
        h1p = self.hid_pad[0]
        w1 = _pad2d(self.lin_ws[0], self.lin_ws[0].shape[0], h1p)
        offs = [0]
        for _, d in self.emb_dims:
            offs.append(offs[-1] + d)
        self.w1_emb = [w1[offs[i]:offs[i + 1], :].astype(jnp.bfloat16)
                       for i in range(len(self.emb_dims))]
        self.w1_cont = (w1[offs[-1]:, :].astype(jnp.bfloat16)
                        if self.no_of_cont else None)
        self.b_pad = [jnp.pad(self.lin_bs[0],
                              (0, h1p - self.lin_layer_sizes[0])).reshape(1, -1)]

        # Remaining hidden layers.
        self.w_hid = []
        for l in range(1, len(self.lin_layer_sizes)):
            w = _pad2d(self.lin_ws[l], self.hid_pad[l - 1], self.hid_pad[l])
            self.w_hid.append(w.astype(jnp.bfloat16))
            self.b_pad.append(
                jnp.pad(self.lin_bs[l],
                        (0, self.hid_pad[l] - self.lin_layer_sizes[l])).reshape(1, -1))

        # Output layer.
        self.w_out_pad = _pad2d(self.w_out, self.hid_pad[-1],
                                self.out_pad).astype(jnp.bfloat16)
        self.b_out_pad = jnp.pad(self.b_out,
                                 (0, self.out_pad - self.output_size)).reshape(1, -1)

    def __call__(self, cont_data, cat_data):
        n_emb = len(self.emb_dims)
        batch = cont_data.shape[0] if self.no_of_cont else cat_data.shape[0]

        # Batch tiling: multiple of 8 sublanes, capped so the double-buffered
        # tiles + resident weights stay far below the VMEM limit.
        tile_b = min(MAX_BATCH_TILE, _round_up(batch, SUBLANE))
        batch_pad = _round_up(batch, tile_b)
        n_tiles = batch_pad // tile_b

        # ---- call 1: fused embeddings + Linear0 + ReLU + stats0 -------------
        args, in_specs = [], []
        if n_emb:
            cat_pad = jnp.pad(cat_data.astype(jnp.int32),
                              ((0, batch_pad - batch), (0, 0)))
            args.append(cat_pad)
            in_specs.append(_batch_spec(tile_b, cat_pad.shape[1]))
        if self.no_of_cont:
            cont_pad = jnp.pad(cont_data.astype(jnp.float32),
                               ((0, batch_pad - batch), (0, 0)))
            args.append(cont_pad)
            in_specs.append(_batch_spec(tile_b, cont_pad.shape[1]))
        for tbl in self.emb_tables:
            args.append(tbl)
            in_specs.append(_resident_spec(tbl))
        for w in self.w1_emb:
            args.append(w)
            in_specs.append(_resident_spec(w))
        if self.no_of_cont:
            args.append(self.w1_cont)
            in_specs.append(_resident_spec(self.w1_cont))
        args.append(self.b_pad[0])
        in_specs.append(_resident_spec(self.b_pad[0]))

        h1p = self.hid_pad[0]
        out_shape = (jax.ShapeDtypeStruct((batch_pad, h1p), jnp.float32),
                     jax.ShapeDtypeStruct((1, h1p), jnp.float32),
                     jax.ShapeDtypeStruct((1, h1p), jnp.float32))
        out_specs = (_batch_spec(tile_b, h1p),
                     _resident_spec(out_shape[1]),
                     _resident_spec(out_shape[2]))
        h, s, q = pl.pallas_call(
            _make_first_layer_kernel(self.emb_dims, self.no_of_cont, batch, tile_b),
            grid=(n_tiles,),
            in_specs=in_specs,
            out_specs=out_specs,
            out_shape=out_shape,
            compiler_params=_cparams("arbitrary"),
        )(*args)

        # ---- hidden layers l = 1..L-1: BN(l-1) + Linear_l + ReLU + stats_l --
        for l in range(1, len(self.lin_layer_sizes)):
            hp_in, hp_out = self.hid_pad[l - 1], self.hid_pad[l]
            out_shape = (jax.ShapeDtypeStruct((batch_pad, hp_out), jnp.float32),
                         jax.ShapeDtypeStruct((1, hp_out), jnp.float32),
                         jax.ShapeDtypeStruct((1, hp_out), jnp.float32))
            out_specs = (_batch_spec(tile_b, hp_out),
                         _resident_spec(out_shape[1]),
                         _resident_spec(out_shape[2]))
            h, s, q = pl.pallas_call(
                _make_bn_linear_kernel(batch, tile_b, True),
                grid=(n_tiles,),
                in_specs=[_batch_spec(tile_b, hp_in),
                          _resident_spec(s), _resident_spec(q),
                          _resident_spec(self.w_hid[l - 1]),
                          _resident_spec(self.b_pad[l])],
                out_specs=out_specs,
                out_shape=out_shape,
                compiler_params=_cparams("arbitrary"),
            )(h, s, q, self.w_hid[l - 1], self.b_pad[l])

        # ---- output layer: BN(last hidden) + Linear (no ReLU / stats) -------
        # No cross-tile accumulation here, so the batch axis is "parallel"
        # (lets v7x's second TensorCore shard it; harmless on v5e/v6e).
        hp_in = self.hid_pad[-1]
        out_pad = pl.pallas_call(
            _make_bn_linear_kernel(batch, tile_b, False),
            grid=(n_tiles,),
            in_specs=[_batch_spec(tile_b, hp_in),
                      _resident_spec(s), _resident_spec(q),
                      _resident_spec(self.w_out_pad),
                      _resident_spec(self.b_out_pad)],
            out_specs=_batch_spec(tile_b, self.out_pad),
            out_shape=jax.ShapeDtypeStruct((batch_pad, self.out_pad), jnp.float32),
            compiler_params=_cparams("parallel"),
        )(h, s, q, self.w_out_pad, self.b_out_pad)

        return out_pad[:batch, :self.output_size]


def reference_forward(model, cont_data, cat_data):
    """Pure-JAX f32 reference with the module's forward semantics."""
    feats = []
    if model.no_of_embs:
        embs = [jnp.take(tbl, cat_data[:, i], axis=0)
                for i, tbl in enumerate(model.emb_tables)]
        feats.append(jnp.concatenate(embs, axis=1))
    if model.no_of_cont:
        feats.append(cont_data)
    x = jnp.concatenate(feats, axis=1) if len(feats) > 1 else feats[0]
    for w, b in zip(model.lin_ws, model.lin_bs):
        x = jnp.maximum(x @ w + b, 0.0)
        mean = jnp.mean(x, axis=0, keepdims=True)
        var = jnp.mean((x - mean) ** 2, axis=0, keepdims=True)
        x = (x - mean) * jax.lax.rsqrt(var + BN_EPS)
    return x @ model.w_out + model.b_out


if __name__ == "__main__":
    key = jax.random.PRNGKey(0)
    k_model, k_cont, k_cat = jax.random.split(key, 3)

    # Small config: 3 categorical features, 4 continuous, 2 hidden layers.
    emb_dims = [(10, 4), (8, 3), (6, 5)]      # no_of_embs = 12
    no_of_cont = 4
    lin_layer_sizes = [32, 16]
    output_size = 4
    batch = 8

    model = FeedForwardNNPallas(emb_dims, no_of_cont, lin_layer_sizes, output_size,
                                emb_dropout=0.04, lin_layer_dropouts=[0.001, 0.01],
                                key=k_model)

    cont_data = jax.random.normal(k_cont, (batch, no_of_cont), dtype=jnp.float32)
    cat_keys = jax.random.split(k_cat, len(emb_dims))
    cat_data = jnp.stack(
        [jax.random.randint(cat_keys[i], (batch,), 0, emb_dims[i][0], dtype=jnp.int32)
         for i in range(len(emb_dims))],
        axis=1)                               # (batch, n_cat_features)

    out = jax.block_until_ready(model(cont_data, cat_data))
    assert out.shape == (batch, output_size)
    assert bool(jnp.all(jnp.isfinite(out)))

    # Sanity check against the pure-f32 reference.  Tolerance is generous
    # because the kernel uses bf16 MXU operands (f32 accumulation); gross
    # wiring / BatchNorm errors would produce O(1) per-element discrepancies.
    ref = reference_forward(model, cont_data, cat_data)
    np.testing.assert_allclose(np.asarray(out), np.asarray(ref), rtol=0.0, atol=0.5)

    print("KERNEL_OK")
</pallas_src>

<mosaic_0001>
module attributes {stable_mosaic.version = 11 : i64} {
  func.func @kernel(%arg0: i32, %arg1: memref<8x3xi32, #tpu.memory_space<vmem>>, %arg2: memref<8x4xf32, #tpu.memory_space<vmem>>, %arg3: memref<10x4xf32, #tpu.memory_space<vmem>>, %arg4: memref<8x3xf32, #tpu.memory_space<vmem>>, %arg5: memref<6x5xf32, #tpu.memory_space<vmem>>, %arg6: memref<4x128xbf16, #tpu.memory_space<vmem>>, %arg7: memref<3x128xbf16, #tpu.memory_space<vmem>>, %arg8: memref<5x128xbf16, #tpu.memory_space<vmem>>, %arg9: memref<4x128xbf16, #tpu.memory_space<vmem>>, %arg10: memref<1x128xf32, #tpu.memory_space<vmem>>, %arg11: memref<8x128xf32, #tpu.memory_space<vmem>>, %arg12: memref<1x128xf32, #tpu.memory_space<vmem>>, %arg13: memref<1x128xf32, #tpu.memory_space<vmem>>) attributes {dimension_semantics = [#tpu.dimension_semantics<arbitrary>], iteration_bounds = array<i64: 1>, scalar_prefetch = 0 : i64, scratch_operands = 0 : i64, tpu.core_type = #tpu.core_type<tc>, window_params = [{transform_indices = @transform_0, window_bounds = array<i64: 8, 3>}, {transform_indices = @transform_1, window_bounds = array<i64: 8, 4>}, {pipeline_mode = #tpu.pipeline_mode<synchronous>, transform_indices = @transform_2, window_bounds = array<i64: 10, 4>}, {pipeline_mode = #tpu.pipeline_mode<synchronous>, transform_indices = @transform_3, window_bounds = array<i64: 8, 3>}, {pipeline_mode = #tpu.pipeline_mode<synchronous>, transform_indices = @transform_4, window_bounds = array<i64: 6, 5>}, {pipeline_mode = #tpu.pipeline_mode<synchronous>, transform_indices = @transform_5, window_bounds = array<i64: 4, 128>}, {pipeline_mode = #tpu.pipeline_mode<synchronous>, transform_indices = @transform_6, window_bounds = array<i64: 3, 128>}, {pipeline_mode = #tpu.pipeline_mode<synchronous>, transform_indices = @transform_7, window_bounds = array<i64: 5, 128>}, {pipeline_mode = #tpu.pipeline_mode<synchronous>, transform_indices = @transform_8, window_bounds = array<i64: 4, 128>}, {pipeline_mode = #tpu.pipeline_mode<synchronous>, transform_indices = @transform_9, window_bounds = array<i64: 1, 128>}, {transform_indices = @transform_10, window_bounds = array<i64: 8, 128>}, {pipeline_mode = #tpu.pipeline_mode<synchronous>, transform_indices = @transform_11, window_bounds = array<i64: 1, 128>}, {pipeline_mode = #tpu.pipeline_mode<synchronous>, transform_indices = @transform_12, window_bounds = array<i64: 1, 128>}]} {
    %cst = arith.constant 0.000000e+00 : f32
    %0 = vector.broadcast %cst : f32 to vector<8x128xf32>
    %1 = tpu.iota {dimensions = array<i32: 1>} : vector<8x10xi32>
    %c0 = arith.constant 0 : index
    %c0_0 = arith.constant 0 : index
    %2 = vector.load %arg1[%c0, %c0_0] : memref<8x3xi32, #tpu.memory_space<vmem>>, vector<8x1xi32>
    %3 = vector.broadcast %2 : vector<8x1xi32> to vector<8x10xi32>
    %4 = arith.cmpi eq, %1, %3 : vector<8x10xi32>
    %5 = arith.extui %4 : vector<8x10xi1> to vector<8x10xi32>
    %6 = arith.sitofp %5 : vector<8x10xi32> to vector<8x10xf32>
    %c0_1 = arith.constant 0 : index
    %c0_2 = arith.constant 0 : index
    %7 = vector.load %arg3[%c0_1, %c0_2] : memref<10x4xf32, #tpu.memory_space<vmem>>, vector<10x4xf32>
    %cst_3 = arith.constant dense<0.000000e+00> : vector<8x4xf32>
    %8 = tpu.matmul %6, %7, %cst_3 {dimension_numbers = #tpu.dot_dimension_numbers<[1], [0], [0], [1], [0, 0, 1, 1], [], []>} : vector<8x10xf32>, vector<10x4xf32>, vector<8x4xf32> -> vector<8x4xf32>
    %9 = arith.truncf %8 : vector<8x4xf32> to vector<8x4xbf16>
    %c0_4 = arith.constant 0 : index
    %c0_5 = arith.constant 0 : index
    %10 = vector.load %arg6[%c0_4, %c0_5] : memref<4x128xbf16, #tpu.memory_space<vmem>>, vector<4x128xbf16>
    %cst_6 = arith.constant dense<0.000000e+00> : vector<8x128xf32>
    %11 = tpu.matmul %9, %10, %cst_6 {dimension_numbers = #tpu.dot_dimension_numbers<[1], [0], [0], [1], [0, 0, 1, 1], [], []>} : vector<8x4xbf16>, vector<4x128xbf16>, vector<8x128xf32> -> vector<8x128xf32>
    %12 = arith.addf %0, %11 : vector<8x128xf32>
    %13 = tpu.iota {dimensions = array<i32: 1>} : vector<8x8xi32>
    %c0_7 = arith.constant 0 : index
    %c1 = arith.constant 1 : index
    %14 = vector.load %arg1[%c0_7, %c1] : memref<8x3xi32, #tpu.memory_space<vmem>>, vector<8x1xi32>
    %15 = vector.broadcast %14 : vector<8x1xi32> to vector<8x8xi32>
    %16 = arith.cmpi eq, %13, %15 : vector<8x8xi32>
    %17 = arith.extui %16 : vector<8x8xi1> to vector<8x8xi32>
    %18 = arith.sitofp %17 : vector<8x8xi32> to vector<8x8xf32>
    %c0_8 = arith.constant 0 : index
    %c0_9 = arith.constant 0 : index
    %19 = vector.load %arg4[%c0_8, %c0_9] : memref<8x3xf32, #tpu.memory_space<vmem>>, vector<8x3xf32>
    %cst_10 = arith.constant dense<0.000000e+00> : vector<8x3xf32>
    %20 = tpu.matmul %18, %19, %cst_10 {dimension_numbers = #tpu.dot_dimension_numbers<[1], [0], [0], [1], [0, 0, 1, 1], [], []>} : vector<8x8xf32>, vector<8x3xf32>, vector<8x3xf32> -> vector<8x3xf32>
    %21 = arith.truncf %20 : vector<8x3xf32> to vector<8x3xbf16>
    %c0_11 = arith.constant 0 : index
    %c0_12 = arith.constant 0 : index
    %22 = vector.load %arg7[%c0_11, %c0_12] : memref<3x128xbf16, #tpu.memory_space<vmem>>, vector<3x128xbf16>
    %cst_13 = arith.constant dense<0.000000e+00> : vector<8x128xf32>
    %23 = tpu.matmul %21, %22, %cst_13 {dimension_numbers = #tpu.dot_dimension_numbers<[1], [0], [0], [1], [0, 0, 1, 1], [], []>} : vector<8x3xbf16>, vector<3x128xbf16>, vector<8x128xf32> -> vector<8x128xf32>
    %24 = arith.addf %12, %23 : vector<8x128xf32>
    %25 = tpu.iota {dimensions = array<i32: 1>} : vector<8x6xi32>
    %c0_14 = arith.constant 0 : index
    %c2 = arith.constant 2 : index
    %26 = vector.load %arg1[%c0_14, %c2] : memref<8x3xi32, #tpu.memory_space<vmem>>, vector<8x1xi32>
    %27 = vector.broadcast %26 : vector<8x1xi32> to vector<8x6xi32>
    %28 = arith.cmpi eq, %25, %27 : vector<8x6xi32>
    %29 = arith.extui %28 : vector<8x6xi1> to vector<8x6xi32>
    %30 = arith.sitofp %29 : vector<8x6xi32> to vector<8x6xf32>
    %c0_15 = arith.constant 0 : index
    %c0_16 = arith.constant 0 : index
    %31 = vector.load %arg5[%c0_15, %c0_16] : memref<6x5xf32, #tpu.memory_space<vmem>>, vector<6x5xf32>
    %cst_17 = arith.constant dense<0.000000e+00> : vector<8x5xf32>
    %32 = tpu.matmul %30, %31, %cst_17 {dimension_numbers = #tpu.dot_dimension_numbers<[1], [0], [0], [1], [0, 0, 1, 1], [], []>} : vector<8x6xf32>, vector<6x5xf32>, vector<8x5xf32> -> vector<8x5xf32>
    %33 = arith.truncf %32 : vector<8x5xf32> to vector<8x5xbf16>
    %c0_18 = arith.constant 0 : index
    %c0_19 = arith.constant 0 : index
    %34 = vector.load %arg8[%c0_18, %c0_19] : memref<5x128xbf16, #tpu.memory_space<vmem>>, vector<5x128xbf16>
    %cst_20 = arith.constant dense<0.000000e+00> : vector<8x128xf32>
    %35 = tpu.matmul %33, %34, %cst_20 {dimension_numbers = #tpu.dot_dimension_numbers<[1], [0], [0], [1], [0, 0, 1, 1], [], []>} : vector<8x5xbf16>, vector<5x128xbf16>, vector<8x128xf32> -> vector<8x128xf32>
    %36 = arith.addf %24, %35 : vector<8x128xf32>
    %c0_21 = arith.constant 0 : index
    %c0_22 = arith.constant 0 : index
    %37 = vector.load %arg2[%c0_21, %c0_22] : memref<8x4xf32, #tpu.memory_space<vmem>>, vector<8x4xf32>
    %38 = arith.truncf %37 : vector<8x4xf32> to vector<8x4xbf16>
    %c0_23 = arith.constant 0 : index
    %c0_24 = arith.constant 0 : index
    %39 = vector.load %arg9[%c0_23, %c0_24] : memref<4x128xbf16, #tpu.memory_space<vmem>>, vector<4x128xbf16>
    %cst_25 = arith.constant dense<0.000000e+00> : vector<8x128xf32>
    %40 = tpu.matmul %38, %39, %cst_25 {dimension_numbers = #tpu.dot_dimension_numbers<[1], [0], [0], [1], [0, 0, 1, 1], [], []>} : vector<8x4xbf16>, vector<4x128xbf16>, vector<8x128xf32> -> vector<8x128xf32>
    %41 = arith.addf %36, %40 : vector<8x128xf32>
    %c0_26 = arith.constant 0 : index
    %c0_27 = arith.constant 0 : index
    %42 = vector.load %arg10[%c0_26, %c0_27] : memref<1x128xf32, #tpu.memory_space<vmem>>, vector<1x128xf32>
    %43 = vector.broadcast %42 : vector<1x128xf32> to vector<8x128xf32>
    %44 = arith.addf %41, %43 : vector<8x128xf32>
    %cst_28 = arith.constant 0.000000e+00 : f32
    %45 = vector.broadcast %cst_28 : f32 to vector<8x128xf32>
    %46 = arith.maximumf %44, %45 : vector<8x128xf32>
    %c0_29 = arith.constant 0 : index
    %c0_30 = arith.constant 0 : index
    %47 = vector.load %arg11[%c0_29, %c0_30] : memref<8x128xf32, #tpu.memory_space<vmem>>, vector<8x128xf32>
    tpu.vector_store %arg11[%c0_29, %c0_30], %46 {strides = array<i32>} : memref<8x128xf32, #tpu.memory_space<vmem>>, vector<8x128xf32>,
    %c0_i32 = arith.constant 0 : i32
    %48 = arith.cmpi eq, %arg0, %c0_i32 : i32
    %49 = arith.extui %48 : i1 to i32
    %c0_i32_31 = arith.constant 0 : i32
    %50 = arith.cmpi ne, %49, %c0_i32_31 : i32
    scf.if %50 {
      %cst_43 = arith.constant 0.000000e+00 : f32
      %72 = vector.broadcast %cst_43 : f32 to vector<1x128xf32>
      %c0_44 = arith.constant 0 : index
      %c0_45 = arith.constant 0 : index
      %73 = vector.load %arg12[%c0_44, %c0_45] : memref<1x128xf32, #tpu.memory_space<vmem>>, vector<1x128xf32>
      tpu.vector_store %arg12[%c0_44, %c0_45], %72 {strides = array<i32>} : memref<1x128xf32, #tpu.memory_space<vmem>>, vector<1x128xf32>,
      %cst_46 = arith.constant 0.000000e+00 : f32
      %74 = vector.broadcast %cst_46 : f32 to vector<1x128xf32>
      %c0_47 = arith.constant 0 : index
      %c0_48 = arith.constant 0 : index
      %75 = vector.load %arg13[%c0_47, %c0_48] : memref<1x128xf32, #tpu.memory_space<vmem>>, vector<1x128xf32>
      tpu.vector_store %arg13[%c0_47, %c0_48], %74 {strides = array<i32>} : memref<1x128xf32, #tpu.memory_space<vmem>>, vector<1x128xf32>,
    } else {
    }
    %51 = tpu.iota {dimensions = array<i32: 0>} : vector<8x1xi32>
    %c8_i32 = arith.constant 8 : i32
    %52 = arith.muli %arg0, %c8_i32 : i32
    %53 = vector.broadcast %52 : i32 to vector<8x1xi32>
    %54 = arith.addi %51, %53 : vector<8x1xi32>
    %c8_i32_32 = arith.constant 8 : i32
    %55 = vector.broadcast %c8_i32_32 : i32 to vector<8x1xi32>
    %56 = arith.cmpi slt, %54, %55 : vector<8x1xi32>
    %57 = arith.extui %56 : vector<8x1xi1> to vector<8x1xi32>
    %58 = arith.sitofp %57 : vector<8x1xi32> to vector<8x1xf32>
    %59 = vector.broadcast %58 : vector<8x1xf32> to vector<8x128xf32>
    %60 = arith.mulf %46, %59 : vector<8x128xf32>
    %c0_33 = arith.constant 0 : index
    %c0_34 = arith.constant 0 : index
    %61 = vector.load %arg12[%c0_33, %c0_34] : memref<1x128xf32, #tpu.memory_space<vmem>>, vector<1x128xf32>
    %cst_35 = arith.constant dense<0.000000e+00> : vector<128xf32>
    %62 = vector.multi_reduction <add>, %60, %cst_35 [0] : vector<8x128xf32> to vector<128xf32>
    %63 = vector.shape_cast %62 : vector<128xf32> to vector<1x128xf32>
    %64 = arith.addf %61, %63 : vector<1x128xf32>
    %c0_36 = arith.constant 0 : index
    %c0_37 = arith.constant 0 : index
    %65 = vector.load %arg12[%c0_36, %c0_37] : memref<1x128xf32, #tpu.memory_space<vmem>>, vector<1x128xf32>
    tpu.vector_store %arg12[%c0_36, %c0_37], %64 {strides = array<i32>} : memref<1x128xf32, #tpu.memory_space<vmem>>, vector<1x128xf32>,
    %c0_38 = arith.constant 0 : index
    %c0_39 = arith.constant 0 : index
    %66 = vector.load %arg13[%c0_38, %c0_39] : memref<1x128xf32, #tpu.memory_space<vmem>>, vector<1x128xf32>
    %67 = arith.mulf %60, %46 : vector<8x128xf32>
    %cst_40 = arith.constant dense<0.000000e+00> : vector<128xf32>
    %68 = vector.multi_reduction <add>, %67, %cst_40 [0] : vector<8x128xf32> to vector<128xf32>
    %69 = vector.shape_cast %68 : vector<128xf32> to vector<1x128xf32>
    %70 = arith.addf %66, %69 : vector<1x128xf32>
    %c0_41 = arith.constant 0 : index
    %c0_42 = arith.constant 0 : index
    %71 = vector.load %arg13[%c0_41, %c0_42] : memref<1x128xf32, #tpu.memory_space<vmem>>, vector<1x128xf32>
    tpu.vector_store %arg13[%c0_41, %c0_42], %70 {strides = array<i32>} : memref<1x128xf32, #tpu.memory_space<vmem>>, vector<1x128xf32>,
    return
  }
  func.func @transform_0(%arg0: i32) -> (i32, i32) {
    %c0_i32 = arith.constant 0 : i32
    %c0_i32_0 = arith.constant 0 : i32
    return %arg0, %c0_i32 : i32, i32
  }
  func.func @transform_1(%arg0: i32) -> (i32, i32) {
    %c0_i32 = arith.constant 0 : i32
    %c0_i32_0 = arith.constant 0 : i32
    return %arg0, %c0_i32 : i32, i32
  }
  func.func @transform_2(%arg0: i32) -> (i32, i32) {
    %c0_i32 = arith.constant 0 : i32
    %c0_i32_0 = arith.constant 0 : i32
    %c0_i32_1 = arith.constant 0 : i32
    return %c0_i32, %c0_i32_0 : i32, i32
  }
  func.func @transform_3(%arg0: i32) -> (i32, i32) {
    %c0_i32 = arith.constant 0 : i32
    %c0_i32_0 = arith.constant 0 : i32
    %c0_i32_1 = arith.constant 0 : i32
    return %c0_i32, %c0_i32_0 : i32, i32
  }
  func.func @transform_4(%arg0: i32) -> (i32, i32) {
    %c0_i32 = arith.constant 0 : i32
    %c0_i32_0 = arith.constant 0 : i32
    %c0_i32_1 = arith.constant 0 : i32
    return %c0_i32, %c0_i32_0 : i32, i32
  }
  func.func @transform_5(%arg0: i32) -> (i32, i32) {
    %c0_i32 = arith.constant 0 : i32
    %c0_i32_0 = arith.constant 0 : i32
    %c0_i32_1 = arith.constant 0 : i32
    return %c0_i32, %c0_i32_0 : i32, i32
  }
  func.func @transform_6(%arg0: i32) -> (i32, i32) {
    %c0_i32 = arith.constant 0 : i32
    %c0_i32_0 = arith.constant 0 : i32
    %c0_i32_1 = arith.constant 0 : i32
    return %c0_i32, %c0_i32_0 : i32, i32
  }
  func.func @transform_7(%arg0: i32) -> (i32, i32) {
    %c0_i32 = arith.constant 0 : i32
    %c0_i32_0 = arith.constant 0 : i32
    %c0_i32_1 = arith.constant 0 : i32
    return %c0_i32, %c0_i32_0 : i32, i32
  }
  func.func @transform_8(%arg0: i32) -> (i32, i32) {
    %c0_i32 = arith.constant 0 : i32
    %c0_i32_0 = arith.constant 0 : i32
    %c0_i32_1 = arith.constant 0 : i32
    return %c0_i32, %c0_i32_0 : i32, i32
  }
  func.func @transform_9(%arg0: i32) -> (i32, i32) {
    %c0_i32 = arith.constant 0 : i32
    %c0_i32_0 = arith.constant 0 : i32
    %c0_i32_1 = arith.constant 0 : i32
    return %c0_i32, %c0_i32_0 : i32, i32
  }
  func.func @transform_10(%arg0: i32) -> (i32, i32) {
    %c0_i32 = arith.constant 0 : i32
    %c0_i32_0 = arith.constant 0 : i32
    return %arg0, %c0_i32 : i32, i32
  }
  func.func @transform_11(%arg0: i32) -> (i32, i32) {
    %c0_i32 = arith.constant 0 : i32
    %c0_i32_0 = arith.constant 0 : i32
    %c0_i32_1 = arith.constant 0 : i32
    return %c0_i32, %c0_i32_0 : i32, i32
  }
  func.func @transform_12(%arg0: i32) -> (i32, i32) {
    %c0_i32 = arith.constant 0 : i32
    %c0_i32_0 = arith.constant 0 : i32
    %c0_i32_1 = arith.constant 0 : i32
    return %c0_i32, %c0_i32_0 : i32, i32
  }
}

</mosaic_0001>

<llo_original>
// kernel: tpu_custom_call.1
$region0: #{tpu_custom_call.1}
  #allocation0 [shape = 'u32[]', space=smem, size = 0x4, offset = 0x4, fixed_abs, tag = 'smem constant byte address 0x4 - core index']
  #allocation1 [shape = 'u32[144,128]{1,0:T(1,128)}', space=vmem, size = 0x12000, scoped, tag = 'internal scratch']
  %s0 = inlined_call_operand.vmem [shape: s32[8,3], index: 0, kind: input, shape index: {}]
  %s1 = inlined_call_operand.vmem [shape: f32[8,4], index: 1, kind: input, shape index: {}]
  %s2 = inlined_call_operand.vmem [shape: f32[10,4], index: 2, kind: input, shape index: {}]
  %s3 = inlined_call_operand.vmem [shape: f32[8,3], index: 3, kind: input, shape index: {}]
  %s4 = inlined_call_operand.vmem [shape: f32[6,5], index: 4, kind: input, shape index: {}]
  %s5 = inlined_call_operand.vmem [shape: bf16[4,128], index: 5, kind: input, shape index: {}]
  %s6 = inlined_call_operand.vmem [shape: bf16[3,128], index: 6, kind: input, shape index: {}]
  %s7 = inlined_call_operand.vmem [shape: bf16[5,128], index: 7, kind: input, shape index: {}]
  %s8 = inlined_call_operand.vmem [shape: bf16[4,128], index: 8, kind: input, shape index: {}]
  %s9 = inlined_call_operand.vmem [shape: f32[1,128], index: 9, kind: input, shape index: {}]
  %s10 = inlined_call_operand.hbm [shape: f32[8,128], index: 10, kind: output, shape index: {0}]
  %s11 = inlined_call_operand.hbm [shape: f32[1,128], index: 11, kind: output, shape index: {1}]
  %s12 = inlined_call_operand.hbm [shape: f32[1,128], index: 12, kind: output, shape index: {2}]
  %13 = xla_tuple %s10, %s11, %s12
  %s14 = sld [smem:[#allocation0]]
  $region70: #{tpu_custom_call.1} parent=0
    _
  %s16 = ssub.s32 1, %s14
  %s17 = scalar_select 0, %s16, %s14
  $region1: #{tpu_custom_call.1} parent=0
    #allocation2 [shape = 'u8[4096]{0}', space=vmem, size = 0x1000, scoped, tag = 'output window, operand 0, single buffered']
    #allocation3 [shape = 's32[1]{0}', space=sflag, size = 0x4, scoped, tag = 'scoped memory for tpu_custom_call.1']
    #allocation4 [shape = 'u8[512]{0}', space=vmem, size = 0x400, scoped, tag = 'output window, operand 1, single buffered']
    #allocation5 [shape = 's32[1]{0}', space=sflag, size = 0x4, scoped, tag = 'scoped memory for tpu_custom_call.1']
    #allocation6 [shape = 'u8[512]{0}', space=vmem, size = 0x400, scoped, tag = 'output window, operand 2, single buffered']
    %18 = vsyncpa [#allocation3], 0
    %19 = vsyncpa [#allocation5], 0
    // Predicated region
    $region2: #{tpu_custom_call.1} parent=1 // pred_check
      _
    $region3: #{tpu_custom_call.1} parent=1 // pred_check_branch
      %21 = sbr.rel (0) target = $region5
    $region4: #{tpu_custom_call.1} parent=1 // pred_region
      _
    $region5: #{tpu_custom_call.1} parent=1 // pred_fallthru
      _
    // Predicated region
    $region6: #{tpu_custom_call.1} parent=1 // pred_check
      _
    $region7: #{tpu_custom_call.1} parent=1 // pred_check_branch
      %23 = sbr.rel (0) target = $region9
    $region8: #{tpu_custom_call.1} parent=1 // pred_region
      _
    $region9: #{tpu_custom_call.1} parent=1 // pred_fallthru
      _
    // Predicated region
    $region10: #{tpu_custom_call.1} parent=1 // pred_check
      _
    $region11: #{tpu_custom_call.1} parent=1 // pred_check_branch
      %25 = sbr.rel (0) target = $region13
    $region12: #{tpu_custom_call.1} parent=1 // pred_region
      _
    $region13: #{tpu_custom_call.1} parent=1 // pred_fallthru
      _
    // Predicated region
    $region14: #{tpu_custom_call.1} parent=1 // pred_check
      _
    $region15: #{tpu_custom_call.1} parent=1 // pred_check_branch
      %27 = sbr.rel (0) target = $region17
    $region16: #{tpu_custom_call.1} parent=1 // pred_region
      _
    $region17: #{tpu_custom_call.1} parent=1 // pred_fallthru
      _
    // Predicated region
    $region18: #{tpu_custom_call.1} parent=1 // pred_check
      _
    $region19: #{tpu_custom_call.1} parent=1 // pred_check_branch
      %29 = sbr.rel (0) target = $region21
    $region20: #{tpu_custom_call.1} parent=1 // pred_region
      _
    $region21: #{tpu_custom_call.1} parent=1 // pred_fallthru
      _
    // Predicated region
    $region22: #{tpu_custom_call.1} parent=1 // pred_check
      _
    $region23: #{tpu_custom_call.1} parent=1 // pred_check_branch
      %31 = sbr.rel (0) target = $region25
    $region24: #{tpu_custom_call.1} parent=1 // pred_region
      _
    $region25: #{tpu_custom_call.1} parent=1 // pred_fallthru
      _
    // Predicated region
    $region26: #{tpu_custom_call.1} parent=1 // pred_check
      _
    $region27: #{tpu_custom_call.1} parent=1 // pred_check_branch
      %33 = sbr.rel (0) target = $region29
    $region28: #{tpu_custom_call.1} parent=1 // pred_region
      _
    $region29: #{tpu_custom_call.1} parent=1 // pred_fallthru
      _
    // Predicated region
    $region30: #{tpu_custom_call.1} parent=1 // pred_check
      _
    $region31: #{tpu_custom_call.1} parent=1 // pred_check_branch
      %35 = sbr.rel (0) target = $region33
    $region32: #{tpu_custom_call.1} parent=1 // pred_region
      _
    $region33: #{tpu_custom_call.1} parent=1 // pred_fallthru
      _
    // Predicated region
    $region34: #{tpu_custom_call.1} parent=1 // pred_check
      _
    $region35: #{tpu_custom_call.1} parent=1 // pred_check_branch
      %37 = sbr.rel (0) target = $region37
    $region36: #{tpu_custom_call.1} parent=1 // pred_region
      _
    $region37: #{tpu_custom_call.1} parent=1 // pred_fallthru
      _
    // Predicated region
    $region38: #{tpu_custom_call.1} parent=1 // pred_check
      _
    $region39: #{tpu_custom_call.1} parent=1 // pred_check_branch
      %39 = sbr.rel (0) target = $region41
    $region40: #{tpu_custom_call.1} parent=1 // pred_region
      _
    $region41: #{tpu_custom_call.1} parent=1 // pred_fallthru
      _
    %v41 = vlaneseq
    %v42 = vand.u32 %v41, 127
    %v43 = vld [vmem:[%s0] sm:$0xff]
    %44 = vset.pattern.permute.xlu0 0
    %45 = vperm.xlu0 %44, %v43
    %v46 = vpop.permute.xlu0 %45
    %vm47 = vcmp.eq.s32.totalorder %v42, %v46
    %v48 = vsel %vm47, 1, 0
    %v49 = vcvt.s32.f32 %v48
    %v50 = vld [vmem:[%s2] sm:$0xff]
    %v51 = vld [vmem:[%s2 + $0x8] sm:$0x3]
    %vm52 = vcmask 80896
    %v54 = vsel %vm52, %v49, 0
    %vm56 = vcmask 1041408
    %v58 = vsel %vm56, %v51, 0
    %60 = vmatprep.subr.mxu0 0.0
    %61 = vmatpush1.msra.mxu0 %v50
    %62 = vmatprep.subr.mxu0 0.0
    %63 = vmatpush1.msra.mxu0 %v58
    %64 = vmatprep.subr.mxu0 0.0
    %65 = vmatpush1.msra.mxu0 0.0
    %66 = vmatprep.subr.mxu0 0.0
    %67 = vmatpush1.msra.mxu0 0.0
    %68 = vmatprep.subr.mxu0 0.0
    %69 = vmatpush1.msra.mxu0 0.0
    %70 = vmatprep.subr.mxu0 0.0
    %71 = vmatpush1.msra.mxu0 0.0
    %72 = vmatprep.subr.mxu0 0.0
    %73 = vmatpush1.msra.mxu0 0.0
    %74 = vmatprep.subr.mxu0 0.0
    %75 = vmatpush1.msra.mxu0 0.0
    %76 = vmatprep.subr.mxu0 0.0
    %77 = vmatpush1.msra.mxu0 0.0
    %78 = vmatprep.subr.mxu0 0.0
    %79 = vmatpush1.msra.mxu0 0.0
    %80 = vmatprep.subr.mxu0 0.0
    %81 = vmatpush1.msra.mxu0 0.0
    %82 = vmatprep.subr.mxu0 0.0
    %83 = vmatpush1.msra.mxu0 0.0
    %84 = vmatprep.subr.mxu0 0.0
    %85 = vmatpush1.msra.mxu0 0.0
    %86 = vmatprep.subr.mxu0 0.0
    %87 = vmatpush1.msra.mxu0 0.0
    %88 = vmatprep.subr.mxu0 0.0
    %89 = vmatpush1.msra.mxu0 0.0
    %90 = vmatprep.subr.mxu0 0.0
    %91 = vmatpush1.msra.mxu0 0.0
    %92 = vmatprep.subr.mxu0 0.0
    %93 = vmatpush1.msra.mxu0 0.0
    %94 = vmatprep.subr.mxu0 0.0
    %95 = vmatpush1.msra.mxu0 0.0
    %96 = vmatprep.subr.mxu0 0.0
    %97 = vmatpush1.msra.mxu0 0.0
    %98 = vmatprep.subr.mxu0 0.0
    %99 = vmatpush1.msra.mxu0 0.0
    %100 = vmatprep.subr.mxu0 0.0
    %101 = vmatpush1.msra.mxu0 0.0
    %102 = vmatprep.subr.mxu0 0.0
    %103 = vmatpush1.msra.mxu0 0.0
    %104 = vmatprep.subr.mxu0 0.0
    %105 = vmatpush1.msra.mxu0 0.0
    %106 = vmatprep.subr.mxu0 0.0
    %107 = vmatpush1.msra.mxu0 0.0
    %108 = vmatprep.subr.mxu0 0.0
    %109 = vmatpush1.msra.mxu0 0.0
    %110 = vmatprep.subr.mxu0 0.0
    %111 = vmatpush1.msra.mxu0 0.0
    %112 = vmatprep.subr.mxu0 0.0
    %113 = vmatpush1.msra.mxu0 0.0
    %114 = vmatprep.subr.mxu0 0.0
    %115 = vmatpush1.msra.mxu0 0.0
    %116 = vmatprep.subr.mxu0 0.0
    %117 = vmatpush1.msra.mxu0 0.0
    %118 = vmatprep.subr.mxu0 0.0
    %119 = vmatpush1.msra.mxu0 0.0
    %120 = vmatprep.subr.mxu0 0.0
    %121 = vmatpush1.msra.mxu0 0.0
    %122 = vmatprep.subr.mxu0 0.0
    %123 = vmatpush1.msra.mxu0 0.0
    %124 = vmatprep.mubr.f32.mxu0 0.0
    %125 = vmatmul.mubr.f32.gmra.mrb[0].mxu0 %v54
    %v126 = vpop.f32.mrb[0].mxu0
    %v127 = vadd.f32 0.0, %v126
    %v128 = vpop.f32.mrb[0].mxu0
    %129 = vdwg.mxu0
    %v130 = vpack.c.bf16 %v127, %v127
    %v131 = vld [vmem:[%s5] sm:$0x3]
    %132 = vset.pattern.permute.xlu0 1
    %133 = vperm.xlu0 %132, %v43
    %v134 = vpop.permute.xlu0 %133
    %vm135 = vcmp.eq.s32.totalorder %v42, %v134
    %v136 = vsel %vm135, 1, 0
    %v137 = vcvt.s32.f32 %v136
    %v138 = vld [vmem:[%s3] sm:$0xff]
    %vm139 = vcmask 64512
    %v141 = vsel %vm139, %v137, 0
    %143 = vmatprep.subr.mxu0 0.0
    %144 = vmatpush1.msra.mxu0 %v138
    %145 = vmatprep.subr.mxu0 0.0
    %146 = vmatpush1.msra.mxu0 0.0
    %147 = vmatprep.subr.mxu0 0.0
    %148 = vmatpush1.msra.mxu0 0.0
    %149 = vmatprep.subr.mxu0 0.0
    %150 = vmatpush1.msra.mxu0 0.0
    %151 = vmatprep.subr.mxu0 0.0
    %152 = vmatpush1.msra.mxu0 0.0
    %153 = vmatprep.subr.mxu0 0.0
    %154 = vmatpush1.msra.mxu0 0.0
    %155 = vmatprep.subr.mxu0 0.0
    %156 = vmatpush1.msra.mxu0 0.0
    %157 = vmatprep.subr.mxu0 0.0
    %158 = vmatpush1.msra.mxu0 0.0
    %159 = vmatprep.subr.mxu0 0.0
    %160 = vmatpush1.msra.mxu0 0.0
    %161 = vmatprep.subr.mxu0 0.0
    %162 = vmatpush1.msra.mxu0 0.0
    %163 = vmatprep.subr.mxu0 0.0
    %164 = vmatpush1.msra.mxu0 0.0
    %165 = vmatprep.subr.mxu0 0.0
    %166 = vmatpush1.msra.mxu0 0.0
    %167 = vmatprep.subr.mxu0 0.0
    %168 = vmatpush1.msra.mxu0 0.0
    %169 = vmatprep.subr.mxu0 0.0
    %170 = vmatpush1.msra.mxu0 0.0
    %171 = vmatprep.subr.mxu0 0.0
    %172 = vmatpush1.msra.mxu0 0.0
    %173 = vmatprep.subr.mxu0 0.0
    %174 = vmatpush1.msra.mxu0 0.0
    %175 = vmatprep.subr.mxu0 0.0
    %176 = vmatpush1.msra.mxu0 0.0
    %177 = vmatprep.subr.mxu0 0.0
    %178 = vmatpush1.msra.mxu0 0.0
    %179 = vmatprep.subr.mxu0 0.0
    %180 = vmatpush1.msra.mxu0 0.0
    %181 = vmatprep.subr.mxu0 0.0
    %182 = vmatpush1.msra.mxu0 0.0
    %183 = vmatprep.subr.mxu0 0.0
    %184 = vmatpush1.msra.mxu0 0.0
    %185 = vmatprep.subr.mxu0 0.0
    %186 = vmatpush1.msra.mxu0 0.0
    %187 = vmatprep.subr.mxu0 0.0
    %188 = vmatpush1.msra.mxu0 0.0
    %189 = vmatprep.subr.mxu0 0.0
    %190 = vmatpush1.msra.mxu0 0.0
    %191 = vmatprep.subr.mxu0 0.0
    %192 = vmatpush1.msra.mxu0 0.0
    %193 = vmatprep.subr.mxu0 0.0
    %194 = vmatpush1.msra.mxu0 0.0
    %195 = vmatprep.subr.mxu0 0.0
    %196 = vmatpush1.msra.mxu0 0.0
    %197 = vmatprep.subr.mxu0 0.0
    %198 = vmatpush1.msra.mxu0 0.0
    %199 = vmatprep.subr.mxu0 0.0
    %200 = vmatpush1.msra.mxu0 0.0
    %201 = vmatprep.subr.mxu0 0.0
    %202 = vmatpush1.msra.mxu0 0.0
    %203 = vmatprep.subr.mxu0 0.0
    %204 = vmatpush1.msra.mxu0 0.0
    %205 = vmatprep.subr.mxu0 0.0
    %206 = vmatpush1.msra.mxu0 0.0
    %207 = vmatprep.mubr.f32.mxu0 0.0
    %208 = vmatmul.mubr.f32.gmra.mrb[0].mxu0 %v141
    %v209 = vpop.f32.mrb[0].mxu0
    %v210 = vadd.f32 0.0, %v209
    %v211 = vpop.f32.mrb[0].mxu0
    %212 = vdwg.mxu0
    %v213 = vpack.c.bf16 %v210, %v210
    %v214 = vld [vmem:[%s6] sm:$0x3]
    %vm215 = vcmask 23552
    %v217 = vsel %vm215, %v213, 0
    %vm219 = vcmask 1040384
    %v220 = vsel %vm219, 4294967295, 65535
    %v221 = vsel %vm56, %v220, 0
    %v223 = vand.u32 %v214, %v221
    %225 = vmatprep.subr.bf16.mxu0 0
    %226 = vmatpush1.bf16.msra.mxu0 %v223
    %227 = vmatprep.subr.bf16.mxu0 0
    %228 = vmatpush1.bf16.msra.mxu0 0
    %229 = vmatprep.subr.bf16.mxu0 0
    %230 = vmatpush1.bf16.msra.mxu0 0
    %231 = vmatprep.subr.bf16.mxu0 0
    %232 = vmatpush1.bf16.msra.mxu0 0
    %233 = vmatprep.subr.bf16.mxu0 0
    %234 = vmatpush1.bf16.msra.mxu0 0
    %235 = vmatprep.subr.bf16.mxu0 0
    %236 = vmatpush1.bf16.msra.mxu0 0
    %237 = vmatprep.subr.bf16.mxu0 0
    %238 = vmatpush1.bf16.msra.mxu0 0
    %239 = vmatprep.subr.bf16.mxu0 0
    %240 = vmatpush1.bf16.msra.mxu0 0
    %241 = vmatprep.subr.bf16.mxu0 0
    %242 = vmatpush1.bf16.msra.mxu0 0
    %243 = vmatprep.subr.bf16.mxu0 0
    %244 = vmatpush1.bf16.msra.mxu0 0
    %245 = vmatprep.subr.bf16.mxu0 0
    %246 = vmatpush1.bf16.msra.mxu0 0
    %247 = vmatprep.subr.bf16.mxu0 0
    %248 = vmatpush1.bf16.msra.mxu0 0
    %249 = vmatprep.subr.bf16.mxu0 0
    %250 = vmatpush1.bf16.msra.mxu0 0
    %251 = vmatprep.subr.bf16.mxu0 0
    %252 = vmatpush1.bf16.msra.mxu0 0
    %253 = vmatprep.subr.bf16.mxu0 0
    %254 = vmatpush1.bf16.msra.mxu0 0
    %255 = vmatprep.subr.bf16.mxu0 0
    %256 = vmatpush1.bf16.msra.mxu0 0
    %257 = vmatprep.mubr.bf16.mxu0 0
    %258 = vmatmul.mubr.bf16.gmra.mrb[0].mxu0 %v217
    %v259 = vpop.f32.mrb[0].mxu0
    %v260 = vadd.f32 0.0, %v259
    %v261 = vpop.f32.mrb[0].mxu0
    %v262 = vpop.f32.mrb[0].mxu0
    %v263 = vpop.f32.mrb[0].mxu0
    %264 = vdwg.mxu0
    %vm265 = vcmask 31744
    %v267 = vsel %vm265, %v130, 0
    %v270 = vsel %vm56, %v131, 0
    %272 = vmatprep.subr.bf16.mxu0 0
    %273 = vmatpush1.bf16.msra.mxu0 %v270
    %274 = vmatprep.subr.bf16.mxu0 0
    %275 = vmatpush1.bf16.msra.mxu0 0
    %276 = vmatprep.subr.bf16.mxu0 0
    %277 = vmatpush1.bf16.msra.mxu0 0
    %278 = vmatprep.subr.bf16.mxu0 0
    %279 = vmatpush1.bf16.msra.mxu0 0
    %280 = vmatprep.subr.bf16.mxu0 0
    %281 = vmatpush1.bf16.msra.mxu0 0
    %282 = vmatprep.subr.bf16.mxu0 0
    %283 = vmatpush1.bf16.msra.mxu0 0
    %284 = vmatprep.subr.bf16.mxu0 0
    %285 = vmatpush1.bf16.msra.mxu0 0
    %286 = vmatprep.subr.bf16.mxu0 0
    %287 = vmatpush1.bf16.msra.mxu0 0
    %288 = vmatprep.subr.bf16.mxu0 0
    %289 = vmatpush1.bf16.msra.mxu0 0
    %290 = vmatprep.subr.bf16.mxu0 0
    %291 = vmatpush1.bf16.msra.mxu0 0
    %292 = vmatprep.subr.bf16.mxu0 0
    %293 = vmatpush1.bf16.msra.mxu0 0
    %294 = vmatprep.subr.bf16.mxu0 0
    %295 = vmatpush1.bf16.msra.mxu0 0
    %296 = vmatprep.subr.bf16.mxu0 0
    %297 = vmatpush1.bf16.msra.mxu0 0
    %298 = vmatprep.subr.bf16.mxu0 0
    %299 = vmatpush1.bf16.msra.mxu0 0
    %300 = vmatprep.subr.bf16.mxu0 0
    %301 = vmatpush1.bf16.msra.mxu0 0
    %302 = vmatprep.subr.bf16.mxu0 0
    %303 = vmatpush1.bf16.msra.mxu0 0
    %304 = vmatprep.mubr.bf16.mxu0 0
    %305 = vmatmul.mubr.bf16.gmra.mrb[0].mxu0 %v267
    %v306 = vpop.f32.mrb[0].mxu0
    %v307 = vadd.f32 %v260, %v306
    %v308 = vpop.f32.mrb[0].mxu0
    %v309 = vpop.f32.mrb[0].mxu0
    %v310 = vpop.f32.mrb[0].mxu0
    %311 = vdwg.mxu0
    %312 = vset.pattern.permute.xlu0 2
    %313 = vperm.xlu0 %312, %v43
    %v314 = vpop.permute.xlu0 %313
    %vm315 = vcmp.eq.s32.totalorder %v42, %v314
    %v316 = vsel %vm315, 1, 0
    %v317 = vcvt.s32.f32 %v316
    %v318 = vld [vmem:[%s4] sm:$0x3f]
    %vm319 = vcmask 48128
    %v321 = vsel %vm319, %v317, 0
    %vm323 = vcmask 1045504
    %v325 = vsel %vm323, %v318, 0
    %327 = vmatprep.subr.mxu0 0.0
    %328 = vmatpush1.msra.mxu0 %v325
    %329 = vmatprep.subr.mxu0 0.0
    %330 = vmatpush1.msra.mxu0 0.0
    %331 = vmatprep.subr.mxu0 0.0
    %332 = vmatpush1.msra.mxu0 0.0
    %333 = vmatprep.subr.mxu0 0.0
    %334 = vmatpush1.msra.mxu0 0.0
    %335 = vmatprep.subr.mxu0 0.0
    %336 = vmatpush1.msra.mxu0 0.0
    %337 = vmatprep.subr.mxu0 0.0
    %338 = vmatpush1.msra.mxu0 0.0
    %339 = vmatprep.subr.mxu0 0.0
    %340 = vmatpush1.msra.mxu0 0.0
    %341 = vmatprep.subr.mxu0 0.0
    %342 = vmatpush1.msra.mxu0 0.0
    %343 = vmatprep.subr.mxu0 0.0
    %344 = vmatpush1.msra.mxu0 0.0
    %345 = vmatprep.subr.mxu0 0.0
    %346 = vmatpush1.msra.mxu0 0.0
    %347 = vmatprep.subr.mxu0 0.0
    %348 = vmatpush1.msra.mxu0 0.0
    %349 = vmatprep.subr.mxu0 0.0
    %350 = vmatpush1.msra.mxu0 0.0
    %351 = vmatprep.subr.mxu0 0.0
    %352 = vmatpush1.msra.mxu0 0.0
    %353 = vmatprep.subr.mxu0 0.0
    %354 = vmatpush1.msra.mxu0 0.0
    %355 = vmatprep.subr.mxu0 0.0
    %356 = vmatpush1.msra.mxu0 0.0
    %357 = vmatprep.subr.mxu0 0.0
    %358 = vmatpush1.msra.mxu0 0.0
    %359 = vmatprep.subr.mxu0 0.0
    %360 = vmatpush1.msra.mxu0 0.0
    %361 = vmatprep.subr.mxu0 0.0
    %362 = vmatpush1.msra.mxu0 0.0
    %363 = vmatprep.subr.mxu0 0.0
    %364 = vmatpush1.msra.mxu0 0.0
    %365 = vmatprep.subr.mxu0 0.0
    %366 = vmatpush1.msra.mxu0 0.0
    %367 = vmatprep.subr.mxu0 0.0
    %368 = vmatpush1.msra.mxu0 0.0
    %369 = vmatprep.subr.mxu0 0.0
    %370 = vmatpush1.msra.mxu0 0.0
    %371 = vmatprep.subr.mxu0 0.0
    %372 = vmatpush1.msra.mxu0 0.0
    %373 = vmatprep.subr.mxu0 0.0
    %374 = vmatpush1.msra.mxu0 0.0
    %375 = vmatprep.subr.mxu0 0.0
    %376 = vmatpush1.msra.mxu0 0.0
    %377 = vmatprep.subr.mxu0 0.0
    %378 = vmatpush1.msra.mxu0 0.0
    %379 = vmatprep.subr.mxu0 0.0
    %380 = vmatpush1.msra.mxu0 0.0
    %381 = vmatprep.subr.mxu0 0.0
    %382 = vmatpush1.msra.mxu0 0.0
    %383 = vmatprep.subr.mxu0 0.0
    %384 = vmatpush1.msra.mxu0 0.0
    %385 = vmatprep.subr.mxu0 0.0
    %386 = vmatpush1.msra.mxu0 0.0
    %387 = vmatprep.subr.mxu0 0.0
    %388 = vmatpush1.msra.mxu0 0.0
    %389 = vmatprep.subr.mxu0 0.0
    %390 = vmatpush1.msra.mxu0 0.0
    %391 = vmatprep.mubr.f32.mxu0 0.0
    %392 = vmatmul.mubr.f32.gmra.mrb[0].mxu0 %v321
    %v393 = vpop.f32.mrb[0].mxu0
    %v394 = vadd.f32 0.0, %v393
    %v395 = vpop.f32.mrb[0].mxu0
    %396 = vdwg.mxu0
    %v397 = vpack.c.bf16 %v394, %v394
    %v398 = vld [vmem:[%s7] sm:$0x7]
    %vm399 = vcmask 39936
    %v401 = vsel %vm399, %v397, 0
    %vm403 = vcmask 1042432
    %v404 = vsel %vm56, 4294967295, 65535
    %v405 = vsel %vm403, %v404, 0
    %v407 = vand.u32 %v398, %v405
    %409 = vmatprep.subr.bf16.mxu0 0
    %410 = vmatpush1.bf16.msra.mxu0 %v407
    %411 = vmatprep.subr.bf16.mxu0 0
    %412 = vmatpush1.bf16.msra.mxu0 0
    %413 = vmatprep.subr.bf16.mxu0 0
    %414 = vmatpush1.bf16.msra.mxu0 0
    %415 = vmatprep.subr.bf16.mxu0 0
    %416 = vmatpush1.bf16.msra.mxu0 0
    %417 = vmatprep.subr.bf16.mxu0 0
    %418 = vmatpush1.bf16.msra.mxu0 0
    %419 = vmatprep.subr.bf16.mxu0 0
    %420 = vmatpush1.bf16.msra.mxu0 0
    %421 = vmatprep.subr.bf16.mxu0 0
    %422 = vmatpush1.bf16.msra.mxu0 0
    %423 = vmatprep.subr.bf16.mxu0 0
    %424 = vmatpush1.bf16.msra.mxu0 0
    %425 = vmatprep.subr.bf16.mxu0 0
    %426 = vmatpush1.bf16.msra.mxu0 0
    %427 = vmatprep.subr.bf16.mxu0 0
    %428 = vmatpush1.bf16.msra.mxu0 0
    %429 = vmatprep.subr.bf16.mxu0 0
    %430 = vmatpush1.bf16.msra.mxu0 0
    %431 = vmatprep.subr.bf16.mxu0 0
    %432 = vmatpush1.bf16.msra.mxu0 0
    %433 = vmatprep.subr.bf16.mxu0 0
    %434 = vmatpush1.bf16.msra.mxu0 0
    %435 = vmatprep.subr.bf16.mxu0 0
    %436 = vmatpush1.bf16.msra.mxu0 0
    %437 = vmatprep.subr.bf16.mxu0 0
    %438 = vmatpush1.bf16.msra.mxu0 0
    %439 = vmatprep.subr.bf16.mxu0 0
    %440 = vmatpush1.bf16.msra.mxu0 0
    %441 = vmatprep.mubr.bf16.mxu0 0
    %442 = vmatmul.mubr.bf16.gmra.mrb[0].mxu0 %v401
    %v443 = vpop.f32.mrb[0].mxu0
    %v444 = vadd.f32 0.0, %v443
    %v445 = vpop.f32.mrb[0].mxu0
    %v446 = vpop.f32.mrb[0].mxu0
    %v447 = vpop.f32.mrb[0].mxu0
    %448 = vdwg.mxu0
    %v449 = vadd.f32 %v307, %v444
    %v450 = vld [vmem:[%s1] sm:$0xff]
    %v451 = vpack.c.bf16 %v450, %v450
    %v452 = vld [vmem:[%s8] sm:$0x3]
    %v454 = vsel %vm265, %v451, 0
    %v457 = vsel %vm56, %v452, 0
    %459 = vmatprep.subr.bf16.mxu0 0
    %460 = vmatpush1.bf16.msra.mxu0 %v457
    %461 = vmatprep.subr.bf16.mxu0 0
    %462 = vmatpush1.bf16.msra.mxu0 0
    %463 = vmatprep.subr.bf16.mxu0 0
    %464 = vmatpush1.bf16.msra.mxu0 0
    %465 = vmatprep.subr.bf16.mxu0 0
    %466 = vmatpush1.bf16.msra.mxu0 0
    %467 = vmatprep.subr.bf16.mxu0 0
    %468 = vmatpush1.bf16.msra.mxu0 0
    %469 = vmatprep.subr.bf16.mxu0 0
    %470 = vmatpush1.bf16.msra.mxu0 0
    %471 = vmatprep.subr.bf16.mxu0 0
    %472 = vmatpush1.bf16.msra.mxu0 0
    %473 = vmatprep.subr.bf16.mxu0 0
    %474 = vmatpush1.bf16.msra.mxu0 0
    %475 = vmatprep.subr.bf16.mxu0 0
    %476 = vmatpush1.bf16.msra.mxu0 0
    %477 = vmatprep.subr.bf16.mxu0 0
    %478 = vmatpush1.bf16.msra.mxu0 0
    %479 = vmatprep.subr.bf16.mxu0 0
    %480 = vmatpush1.bf16.msra.mxu0 0
    %481 = vmatprep.subr.bf16.mxu0 0
    %482 = vmatpush1.bf16.msra.mxu0 0
    %483 = vmatprep.subr.bf16.mxu0 0
    %484 = vmatpush1.bf16.msra.mxu0 0
    %485 = vmatprep.subr.bf16.mxu0 0
    %486 = vmatpush1.bf16.msra.mxu0 0
    %487 = vmatprep.subr.bf16.mxu0 0
    %488 = vmatpush1.bf16.msra.mxu0 0
    %489 = vmatprep.subr.bf16.mxu0 0
    %490 = vmatpush1.bf16.msra.mxu0 0
    %491 = vmatprep.mubr.bf16.mxu0 0
    %492 = vmatmul.mubr.bf16.gmra.mrb[0].mxu0 %v454
    %v493 = vpop.f32.mrb[0].mxu0
    %v494 = vadd.f32 0.0, %v493
    %v495 = vpop.f32.mrb[0].mxu0
    %v496 = vpop.f32.mrb[0].mxu0
    %v497 = vpop.f32.mrb[0].mxu0
    %498 = vdwg.mxu0
    %v499 = vadd.f32 %v449, %v494
    %v500 = vld [vmem:[%s9] sm:$0x1]
    %v502 = vlaneseq
    %v503 = vshrl.u32 %v502, 7
    %v504 = vsub.s32 0, %v503
    %v505 = vrot.slane %v500, %v504
    %v507 = vadd.f32 %v499, %v505
    %v508 = vmax.f32 %v507, 0.0
    %509 = vst [vmem:[#allocation2] sm:$0xff] %v508
    %p510 = scmp.eq.s32.totalorder 0, 0
    // Predicated region
    $region42: #{tpu_custom_call.1} parent=1 // pred_check
      %p511 = pneg %p510
    $region43: #{tpu_custom_call.1} parent=1 // pred_check_branch
      %513 = sbr.rel (%p511) target = $region45
    $region44: #{tpu_custom_call.1} parent=1 // pred_region
      %514 = vst [vmem:[#allocation4] sm:$0x1] 0.0
      %515 = vst [vmem:[#allocation6] sm:$0x1] 0.0
    $region45: #{tpu_custom_call.1} parent=1 // pred_fallthru
      _
    %v516 = vlaneseq
    %v517 = vshrl.u32 %v516, 7
    %s518 = smul.u32 0, 8
    %v519 = vstv %s518
    %v520 = vadd.s32 %v517, %v519
    %vm521 = vcmp.lt.s32.totalorder %v520, 8
    %v522 = vsel %vm521, 1, 0
    %v523 = vcvt.s32.f32 %v522
    %v524 = vmul.f32 %v508, %v523
    %v525 = vld [vmem:[#allocation4] sm:$0x1]
    %v526 = vrot.slane %v524, 4
    %v527 = vadd.f32 %v524, %v526
    %v528 = vrot.slane %v527, 2
    %v529 = vadd.f32 %v527, %v528
    %v530 = vrot.slane %v529, 1
    %v531 = vadd.f32 %v529, %v530
    %v532 = vadd.f32 %v525, %v531
    %533 = vst [vmem:[#allocation4] sm:$0x1] %v532
    %v534 = vld [vmem:[#allocation6] sm:$0x1]
    %v535 = vmul.f32 %v524, %v508
    %v536 = vrot.slane %v535, 4
    %v537 = vadd.f32 %v535, %v536
    %v538 = vrot.slane %v537, 2
    %v539 = vadd.f32 %v537, %v538
    %v540 = vrot.slane %v539, 1
    %v541 = vadd.f32 %v539, %v540
    %v542 = vadd.f32 %v534, %v541
    %543 = vst [vmem:[#allocation6] sm:$0x1] %v542
    // Predicated region
    $region46: #{tpu_custom_call.1} parent=1 // pred_check
      _
    $region47: #{tpu_custom_call.1} parent=1 // pred_check_branch
      %545 = sbr.rel (0) target = $region49
    $region48: #{tpu_custom_call.1} parent=1 // pred_region
      %s547 = ssub.s32 128, 128
      %548 = vsyncadd [#allocation3], %s547
      %s550 = sshll.u32 [#allocation2], 4
      %s551 = int_to_ptr.vmem [resolvable:$true] %s550
      %553 = dma.vmem_to_hbm [thread:$0]  %s551, 128, %s10, [#allocation3]
    $region49: #{tpu_custom_call.1} parent=1 // pred_fallthru
      _
    // Predicated region
    $region50: #{tpu_custom_call.1} parent=1 // pred_check
      _
    $region51: #{tpu_custom_call.1} parent=1 // pred_check_branch
      %555 = sbr.rel (0) target = $region53
    $region52: #{tpu_custom_call.1} parent=1 // pred_region
      %s557 = ssub.s32 16, 16
      %558 = vsyncadd [#allocation5], %s557
      %s560 = sshll.u32 [#allocation4], 4
      %s561 = int_to_ptr.vmem [resolvable:$true] %s560
      %563 = dma.vmem_to_hbm [thread:$0]  %s561, 16, %s11, [#allocation5]
    $region53: #{tpu_custom_call.1} parent=1 // pred_fallthru
      _
    // Predicated region
    $region54: #{tpu_custom_call.1} parent=1 // pred_check
      _
    $region55: #{tpu_custom_call.1} parent=1 // pred_check_branch
      %565 = sbr.rel (0) target = $region57
    $region56: #{tpu_custom_call.1} parent=1 // pred_region
      %s567 = ssub.s32 16, 16
      %568 = vsyncadd [#allocation5], %s567
      %s570 = sshll.u32 [#allocation6], 4
      %s571 = int_to_ptr.vmem [resolvable:$true] %s570
      %573 = dma.vmem_to_hbm [thread:$0]  %s571, 16, %s12, [#allocation5]
    $region57: #{tpu_custom_call.1} parent=1 // pred_fallthru
      _
    // Predicated region
    $region58: #{tpu_custom_call.1} parent=1 // pred_check
      _
    $region59: #{tpu_custom_call.1} parent=1 // pred_check_branch
      %575 = sbr.rel (0) target = $region61
    $region60: #{tpu_custom_call.1} parent=1 // pred_region
      %576 = dma.done [#allocation3], 128
    $region61: #{tpu_custom_call.1} parent=1 // pred_fallthru
      _
    // Predicated region
    $region62: #{tpu_custom_call.1} parent=1 // pred_check
      _
    $region63: #{tpu_custom_call.1} parent=1 // pred_check_branch
      %578 = sbr.rel (0) target = $region65
    $region64: #{tpu_custom_call.1} parent=1 // pred_region
      %579 = dma.done [#allocation5], 16
    $region65: #{tpu_custom_call.1} parent=1 // pred_fallthru
      _
    // Predicated region
    $region66: #{tpu_custom_call.1} parent=1 // pred_check
      _
    $region67: #{tpu_custom_call.1} parent=1 // pred_check_branch
      %581 = sbr.rel (0) target = $region69
    $region68: #{tpu_custom_call.1} parent=1 // pred_region
      %582 = dma.done [#allocation5], 16
    $region69: #{tpu_custom_call.1} parent=1 // pred_fallthru
      _
    %583 = vsyncpa [#allocation3], 1
    %584 = vsyncpa [#allocation5], 1

</llo_original>
